<compile_context>
chip_gen: v5e
topology: v5e:2x2
jax: 0.10.0
libtpu: 0.0.40
codegen_flags: <defaults>
</compile_context>

<pallas_src>
import functools

import jax
import jax.numpy as jnp
from jax.experimental import pallas as pl
from jax.experimental.pallas import tpu as pltpu


# ---------------------------------------------------------------------------
# Phase 1: tiled global average pool + squeeze MLP + sigmoid  ->  gate (C, 1)
# ---------------------------------------------------------------------------
def _pool_mlp_kernel(x_ref, w1t_ref, b1_ref, w2_ref, b2_ref, gate_ref, acc_ref,
                     *, inv_hw):
    # x_ref:    (C, THW) one spatial tile of one batch element (HW on lanes)
    # w1t_ref:  (C, S)   first 1x1-conv weight, pre-transposed in the wrapper
    # b1_ref:   (1, S)
    # w2_ref:   (C, S)   second 1x1-conv weight (original PyTorch layout)
    # b2_ref:   (C, 1)
    # gate_ref: (C, 1)   float32 output gate for this batch element
    # acc_ref:  (C, 1)   float32 running spatial sum (scratch)
    t = pl.program_id(1)

    @pl.when(t == 0)
    def _init():
        acc_ref[...] = jnp.zeros_like(acc_ref)

    # Partial spatial sum, accumulated in float32 (lane-axis reduction).
    acc_ref[...] += jnp.sum(x_ref[...].astype(jnp.float32), axis=1,
                            keepdims=True)

    @pl.when(t == pl.num_programs(1) - 1)
    def _finalize():
        pooled = acc_ref[...] * inv_hw                                  # (C, 1)
        # Squeeze MLP in column/row orientation -> no in-kernel transposes.
        # Sizes are tiny (C x S), so broadcast + reduce on the VPU/XLU is free
        # relative to the HBM-bound passes over x.
        s1 = jnp.sum(w1t_ref[...] * pooled, axis=0, keepdims=True) + b1_ref[...]  # (1, S)
        s1 = s1 * jax.nn.sigmoid(s1)                                    # Swish
        s2 = jnp.sum(w2_ref[...] * s1, axis=1, keepdims=True) + b2_ref[...]       # (C, 1)
        gate_ref[...] = jax.nn.sigmoid(s2)


# ---------------------------------------------------------------------------
# Phase 2: lane-dense streaming gating pass   out = x * gate
# ---------------------------------------------------------------------------
def _gate_kernel(x_ref, gate_ref, o_ref):
    # x_ref: (C, THW), gate_ref: (C, 1) f32 -> broadcast along lanes.
    o_ref[...] = (x_ref[...] * gate_ref[...]).astype(o_ref.dtype)


def _pick_hw_tile(hw, c, itemsize):
    """Largest multiple of 128 that divides hw and keeps one (C, tile) block
    under ~2 MiB (so double-buffered in+out blocks fit every TPU generation's
    scoped VMEM default).  Falls back to the full extent if hw % 128 != 0."""
    if hw % 128 != 0:
        return hw
    budget = 2 * 1024 * 1024
    max_tile = max(128, (budget // max(1, c * itemsize)) // 128 * 128)
    tile = 128
    t = 128
    limit = min(hw, max_tile)
    while t <= limit:
        if hw % t == 0:
            tile = t
        t += 128
    return tile


def se_module(x_nchw, w1, b1, w2, b2):
    """x_nchw: (N, C, H, W); w1: (S, C); b1: (S,); w2: (C, S); b2: (C,)."""
    N, C, H, W = x_nchw.shape
    S = w1.shape[0]
    HW = H * W

    x = x_nchw.reshape(N, C, HW)          # contiguous reshape, no transpose
    thw = _pick_hw_tile(HW, C, x.dtype.itemsize)
    n_tiles = HW // thw

    # Trace-time weight layout prep (done once, outside the kernels).
    w1t = jnp.transpose(w1)               # (C, S)
    b1r = b1.reshape(1, S)
    b2c = b2.reshape(C, 1)

    cparams = pltpu.CompilerParams(
        dimension_semantics=("parallel", "arbitrary"),
        vmem_limit_bytes=32 * 1024 * 1024,
    )

    gate = pl.pallas_call(
        functools.partial(_pool_mlp_kernel, inv_hw=1.0 / HW),
        out_shape=jax.ShapeDtypeStruct((N, C, 1), jnp.float32),
        grid_spec=pltpu.PrefetchScalarGridSpec(
            num_scalar_prefetch=0,
            grid=(N, n_tiles),
            in_specs=[
                pl.BlockSpec((None, C, thw), lambda n, t: (n, 0, t)),
                pl.BlockSpec((C, S), lambda n, t: (0, 0)),
                pl.BlockSpec((1, S), lambda n, t: (0, 0)),
                pl.BlockSpec((C, S), lambda n, t: (0, 0)),
                pl.BlockSpec((C, 1), lambda n, t: (0, 0)),
            ],
            out_specs=pl.BlockSpec((None, C, 1), lambda n, t: (n, 0, 0)),
            scratch_shapes=[pltpu.VMEM((C, 1), jnp.float32)],
        ),
        compiler_params=cparams,
    )(x, w1t, b1r, w2, b2c)

    out = pl.pallas_call(
        _gate_kernel,
        out_shape=jax.ShapeDtypeStruct((N, C, HW), x.dtype),
        grid_spec=pltpu.PrefetchScalarGridSpec(
            num_scalar_prefetch=0,
            grid=(N, n_tiles),
            in_specs=[
                pl.BlockSpec((None, C, thw), lambda n, t: (n, 0, t)),
                pl.BlockSpec((None, C, 1), lambda n, t: (n, 0, 0)),
            ],
            out_specs=pl.BlockSpec((None, C, thw), lambda n, t: (n, 0, t)),
        ),
        compiler_params=pltpu.CompilerParams(
            dimension_semantics=("parallel", "parallel"),
            vmem_limit_bytes=32 * 1024 * 1024,
        ),
    )(x, gate)

    return out.reshape(N, C, H, W)        # contiguous reshape back to NCHW


def se_module_ref(x_nchw, w1, b1, w2, b2):
    """Pure-JAX reference matching the PyTorch semantics."""
    pooled = jnp.mean(x_nchw, axis=(2, 3))                       # (N, C)
    s1 = pooled @ w1.T + b1                                      # (N, S)
    s1 = s1 * jax.nn.sigmoid(s1)
    s2 = s1 @ w2.T + b2                                          # (N, C)
    gate = jax.nn.sigmoid(s2)[:, :, None, None]                  # (N, C, 1, 1)
    return x_nchw * gate


if __name__ == "__main__":
    N, C, H, W = 2, 4, 16, 16
    S = 2  # squeeze_ch

    key = jax.random.PRNGKey(0)
    kx, k1, k2, k3, k4 = jax.random.split(key, 5)

    x = jax.random.normal(kx, (N, C, H, W), dtype=jnp.float32)
    # Conv2d(in_, squeeze_ch, 1) weights: (S, C, 1, 1) -> (S, C); bias (S,)
    w1 = jax.random.normal(k1, (S, C), dtype=jnp.float32) * 0.5
    b1 = jax.random.normal(k2, (S,), dtype=jnp.float32) * 0.1
    # Conv2d(squeeze_ch, in_, 1) weights: (C, S, 1, 1) -> (C, S); bias (C,)
    w2 = jax.random.normal(k3, (C, S), dtype=jnp.float32) * 0.5
    b2 = jax.random.normal(k4, (C,), dtype=jnp.float32) * 0.1

    se_fn = jax.jit(se_module)
    out = se_fn(x, w1, b1, w2, b2)
    out = jax.block_until_ready(out)

    ref = se_module_ref(x, w1, b1, w2, b2)
    assert out.shape == (N, C, H, W)
    assert jnp.allclose(out, ref, atol=1e-5, rtol=1e-5), "mismatch vs reference"

    print("KERNEL_OK")
</pallas_src>

<mosaic_0001>
module attributes {stable_mosaic.version = 11 : i64} {
  func.func @_gate_kernel(%arg0: i32, %arg1: i32, %arg2: memref<1x4x256xf32, #tpu.memory_space<vmem>>, %arg3: memref<1x4x1xf32, #tpu.memory_space<vmem>>, %arg4: memref<1x4x256xf32, #tpu.memory_space<vmem>>) attributes {dimension_semantics = [#tpu.dimension_semantics<parallel>, #tpu.dimension_semantics<parallel>], iteration_bounds = array<i64: 2, 1>, scalar_prefetch = 0 : i64, scratch_operands = 0 : i64, tpu.core_type = #tpu.core_type<tc>, window_params = [{transform_indices = @transform_0, window_bounds = array<i64: 1, 4, 256>}, {transform_indices = @transform_1, window_bounds = array<i64: 1, 4, 1>}, {transform_indices = @transform_2, window_bounds = array<i64: 1, 4, 256>}]} {
    %c0 = arith.constant 0 : index
    %c0_0 = arith.constant 0 : index
    %c0_1 = arith.constant 0 : index
    %0 = vector.load %arg2[%c0, %c0_0, %c0_1] : memref<1x4x256xf32, #tpu.memory_space<vmem>>, vector<1x4x256xf32>
    %1 = vector.shape_cast %0 : vector<1x4x256xf32> to vector<4x256xf32>
    %c0_2 = arith.constant 0 : index
    %c0_3 = arith.constant 0 : index
    %c0_4 = arith.constant 0 : index
    %2 = vector.load %arg3[%c0_2, %c0_3, %c0_4] : memref<1x4x1xf32, #tpu.memory_space<vmem>>, vector<1x4x1xf32>
    %3 = vector.shape_cast %2 : vector<1x4x1xf32> to vector<4x1xf32>
    %4 = vector.broadcast %3 : vector<4x1xf32> to vector<4x256xf32>
    %5 = arith.mulf %1, %4 : vector<4x256xf32>
    %c0_5 = arith.constant 0 : index
    %c0_6 = arith.constant 0 : index
    %c0_7 = arith.constant 0 : index
    %6 = vector.load %arg4[%c0_5, %c0_6, %c0_7] : memref<1x4x256xf32, #tpu.memory_space<vmem>>, vector<1x4x256xf32>
    %7 = vector.shape_cast %6 : vector<1x4x256xf32> to vector<4x256xf32>
    %8 = vector.shape_cast %5 : vector<4x256xf32> to vector<1x4x256xf32>
    tpu.vector_store %arg4[%c0_5, %c0_6, %c0_7], %8 {strides = array<i32>} : memref<1x4x256xf32, #tpu.memory_space<vmem>>, vector<1x4x256xf32>,
    return
  }
  func.func @transform_0(%arg0: i32, %arg1: i32) -> (i32, i32, i32) {
    %c0_i32 = arith.constant 0 : i32
    %c0_i32_0 = arith.constant 0 : i32
    return %arg0, %c0_i32, %arg1 : i32, i32, i32
  }
  func.func @transform_1(%arg0: i32, %arg1: i32) -> (i32, i32, i32) {
    %c0_i32 = arith.constant 0 : i32
    %c0_i32_0 = arith.constant 0 : i32
    %c0_i32_1 = arith.constant 0 : i32
    return %arg0, %c0_i32, %c0_i32_0 : i32, i32, i32
  }
  func.func @transform_2(%arg0: i32, %arg1: i32) -> (i32, i32, i32) {
    %c0_i32 = arith.constant 0 : i32
    %c0_i32_0 = arith.constant 0 : i32
    return %arg0, %c0_i32, %arg1 : i32, i32, i32
  }
}

module attributes {stable_mosaic.version = 11 : i64} {
  func.func @_pool_mlp_kernel(%arg0: i32, %arg1: i32, %arg2: memref<1x4x256xf32, #tpu.memory_space<vmem>>, %arg3: memref<4x2xf32, #tpu.memory_space<vmem>>, %arg4: memref<1x2xf32, #tpu.memory_space<vmem>>, %arg5: memref<4x2xf32, #tpu.memory_space<vmem>>, %arg6: memref<4x1xf32, #tpu.memory_space<vmem>>, %arg7: memref<1x4x1xf32, #tpu.memory_space<vmem>>, %arg8: memref<4x1xf32, #tpu.memory_space<vmem>>) attributes {dimension_semantics = [#tpu.dimension_semantics<parallel>, #tpu.dimension_semantics<arbitrary>], iteration_bounds = array<i64: 2, 1>, scalar_prefetch = 0 : i64, scratch_operands = 1 : i64, tpu.core_type = #tpu.core_type<tc>, window_params = [{transform_indices = @transform_0, window_bounds = array<i64: 1, 4, 256>}, {pipeline_mode = #tpu.pipeline_mode<synchronous>, transform_indices = @transform_1, window_bounds = array<i64: 4, 2>}, {pipeline_mode = #tpu.pipeline_mode<synchronous>, transform_indices = @transform_2, window_bounds = array<i64: 1, 2>}, {pipeline_mode = #tpu.pipeline_mode<synchronous>, transform_indices = @transform_3, window_bounds = array<i64: 4, 2>}, {pipeline_mode = #tpu.pipeline_mode<synchronous>, transform_indices = @transform_4, window_bounds = array<i64: 4, 1>}, {transform_indices = @transform_5, window_bounds = array<i64: 1, 4, 1>}]} {
    %c0_i32 = arith.constant 0 : i32
    %0 = arith.cmpi eq, %arg1, %c0_i32 : i32
    %1 = arith.extui %0 : i1 to i32
    %c0_i32_0 = arith.constant 0 : i32
    %2 = arith.cmpi ne, %1, %c0_i32_0 : i32
    scf.if %2 {
      %cst_9 = arith.constant 0.000000e+00 : f32
      %13 = vector.broadcast %cst_9 : f32 to vector<4x1xf32>
      %c0_10 = arith.constant 0 : index
      %c0_11 = arith.constant 0 : index
      %14 = vector.load %arg8[%c0_10, %c0_11] : memref<4x1xf32, #tpu.memory_space<vmem>>, vector<4x1xf32>
      tpu.vector_store %arg8[%c0_10, %c0_11], %13 {strides = array<i32>} : memref<4x1xf32, #tpu.memory_space<vmem>>, vector<4x1xf32>,
    } else {
    }
    %c0 = arith.constant 0 : index
    %c0_1 = arith.constant 0 : index
    %3 = vector.load %arg8[%c0, %c0_1] : memref<4x1xf32, #tpu.memory_space<vmem>>, vector<4x1xf32>
    %c0_2 = arith.constant 0 : index
    %c0_3 = arith.constant 0 : index
    %c0_4 = arith.constant 0 : index
    %4 = vector.load %arg2[%c0_2, %c0_3, %c0_4] : memref<1x4x256xf32, #tpu.memory_space<vmem>>, vector<1x4x256xf32>
    %5 = vector.shape_cast %4 : vector<1x4x256xf32> to vector<4x256xf32>
    %cst = arith.constant dense<0.000000e+00> : vector<4xf32>
    %6 = vector.multi_reduction <add>, %5, %cst [1] : vector<4x256xf32> to vector<4xf32>
    %7 = vector.shape_cast %6 : vector<4xf32> to vector<4x1xf32>
    %8 = arith.addf %3, %7 : vector<4x1xf32>
    %c0_5 = arith.constant 0 : index
    %c0_6 = arith.constant 0 : index
    %9 = vector.load %arg8[%c0_5, %c0_6] : memref<4x1xf32, #tpu.memory_space<vmem>>, vector<4x1xf32>
    tpu.vector_store %arg8[%c0_5, %c0_6], %8 {strides = array<i32>} : memref<4x1xf32, #tpu.memory_space<vmem>>, vector<4x1xf32>,
    %c0_i32_7 = arith.constant 0 : i32
    %10 = arith.cmpi eq, %arg1, %c0_i32_7 : i32
    %11 = arith.extui %10 : i1 to i32
    %c0_i32_8 = arith.constant 0 : i32
    %12 = arith.cmpi ne, %11, %c0_i32_8 : i32
    scf.if %12 {
      %c0_9 = arith.constant 0 : index
      %c0_10 = arith.constant 0 : index
      %13 = vector.load %arg8[%c0_9, %c0_10] : memref<4x1xf32, #tpu.memory_space<vmem>>, vector<4x1xf32>
      %cst_11 = arith.constant 3.906250e-03 : f32
      %14 = vector.broadcast %cst_11 : f32 to vector<4x1xf32>
      %15 = arith.mulf %13, %14 : vector<4x1xf32>
      %c0_12 = arith.constant 0 : index
      %c0_13 = arith.constant 0 : index
      %16 = vector.load %arg3[%c0_12, %c0_13] : memref<4x2xf32, #tpu.memory_space<vmem>>, vector<4x2xf32>
      %17 = vector.broadcast %15 : vector<4x1xf32> to vector<4x2xf32>
      %18 = arith.mulf %16, %17 : vector<4x2xf32>
      %cst_14 = arith.constant dense<0.000000e+00> : vector<2xf32>
      %19 = vector.multi_reduction <add>, %18, %cst_14 [0] : vector<4x2xf32> to vector<2xf32>
      %20 = vector.shape_cast %19 : vector<2xf32> to vector<1x2xf32>
      %c0_15 = arith.constant 0 : index
      %c0_16 = arith.constant 0 : index
      %21 = vector.load %arg4[%c0_15, %c0_16] : memref<1x2xf32, #tpu.memory_space<vmem>>, vector<1x2xf32>
      %22 = arith.addf %20, %21 : vector<1x2xf32>
      %23 = arith.negf %22 : vector<1x2xf32>
      %24 = math.exp %23 : vector<1x2xf32>
      %cst_17 = arith.constant 1.000000e+00 : f32
      %25 = vector.broadcast %cst_17 : f32 to vector<1x2xf32>
      %26 = arith.addf %25, %24 : vector<1x2xf32>
      %27 = arith.divf %25, %26 : vector<1x2xf32>
      %28 = arith.mulf %22, %27 : vector<1x2xf32>
      %c0_18 = arith.constant 0 : index
      %c0_19 = arith.constant 0 : index
      %29 = vector.load %arg5[%c0_18, %c0_19] : memref<4x2xf32, #tpu.memory_space<vmem>>, vector<4x2xf32>
      %30 = vector.broadcast %28 : vector<1x2xf32> to vector<4x2xf32>
      %31 = arith.mulf %29, %30 : vector<4x2xf32>
      %cst_20 = arith.constant dense<0.000000e+00> : vector<4xf32>
      %32 = vector.multi_reduction <add>, %31, %cst_20 [1] : vector<4x2xf32> to vector<4xf32>
      %33 = vector.shape_cast %32 : vector<4xf32> to vector<4x1xf32>
      %c0_21 = arith.constant 0 : index
      %c0_22 = arith.constant 0 : index
      %34 = vector.load %arg6[%c0_21, %c0_22] : memref<4x1xf32, #tpu.memory_space<vmem>>, vector<4x1xf32>
      %35 = arith.addf %33, %34 : vector<4x1xf32>
      %36 = arith.negf %35 : vector<4x1xf32>
      %37 = math.exp %36 : vector<4x1xf32>
      %cst_23 = arith.constant 1.000000e+00 : f32
      %38 = vector.broadcast %cst_23 : f32 to vector<4x1xf32>
      %39 = arith.addf %38, %37 : vector<4x1xf32>
      %40 = arith.divf %38, %39 : vector<4x1xf32>
      %c0_24 = arith.constant 0 : index
      %c0_25 = arith.constant 0 : index
      %c0_26 = arith.constant 0 : index
      %41 = vector.load %arg7[%c0_24, %c0_25, %c0_26] : memref<1x4x1xf32, #tpu.memory_space<vmem>>, vector<1x4x1xf32>
      %42 = vector.shape_cast %41 : vector<1x4x1xf32> to vector<4x1xf32>
      %43 = vector.shape_cast %40 : vector<4x1xf32> to vector<1x4x1xf32>
      tpu.vector_store %arg7[%c0_24, %c0_25, %c0_26], %43 {strides = array<i32>} : memref<1x4x1xf32, #tpu.memory_space<vmem>>, vector<1x4x1xf32>,
    } else {
    }
    return
  }
  func.func @transform_0(%arg0: i32, %arg1: i32) -> (i32, i32, i32) {
    %c0_i32 = arith.constant 0 : i32
    %c0_i32_0 = arith.constant 0 : i32
    return %arg0, %c0_i32, %arg1 : i32, i32, i32
  }
  func.func @transform_1(%arg0: i32, %arg1: i32) -> (i32, i32) {
    %c0_i32 = arith.constant 0 : i32
    %c0_i32_0 = arith.constant 0 : i32
    %c0_i32_1 = arith.constant 0 : i32
    return %c0_i32, %c0_i32_0 : i32, i32
  }
  func.func @transform_2(%arg0: i32, %arg1: i32) -> (i32, i32) {
    %c0_i32 = arith.constant 0 : i32
    %c0_i32_0 = arith.constant 0 : i32
    %c0_i32_1 = arith.constant 0 : i32
    return %c0_i32, %c0_i32_0 : i32, i32
  }
  func.func @transform_3(%arg0: i32, %arg1: i32) -> (i32, i32) {
    %c0_i32 = arith.constant 0 : i32
    %c0_i32_0 = arith.constant 0 : i32
    %c0_i32_1 = arith.constant 0 : i32
    return %c0_i32, %c0_i32_0 : i32, i32
  }
  func.func @transform_4(%arg0: i32, %arg1: i32) -> (i32, i32) {
    %c0_i32 = arith.constant 0 : i32
    %c0_i32_0 = arith.constant 0 : i32
    %c0_i32_1 = arith.constant 0 : i32
    return %c0_i32, %c0_i32_0 : i32, i32
  }
  func.func @transform_5(%arg0: i32, %arg1: i32) -> (i32, i32, i32) {
    %c0_i32 = arith.constant 0 : i32
    %c0_i32_0 = arith.constant 0 : i32
    %c0_i32_1 = arith.constant 0 : i32
    return %arg0, %c0_i32, %c0_i32_0 : i32, i32, i32
  }
}

</mosaic_0001>

<llo_original>
// kernel: se_module.3
$region0: #{se_module.3}
  #allocation0 [shape = 'u32[]', space=smem, size = 0x4, offset = 0x4, fixed_abs, tag = 'smem constant byte address 0x4 - core index']
  #allocation1 [shape = 'u32[72,128]{1,0:T(1,128)}', space=vmem, size = 0x9000, scoped, tag = 'internal scratch']
  %s0 = inlined_call_operand.vmem [shape: f32[2,4,256], index: 0, kind: input, shape index: {}]
  %s1 = inlined_call_operand.vmem [shape: f32[2,4,1], index: 1, kind: input, shape index: {}]
  %s2 = inlined_call_operand.vmem [shape: f32[2,4,256], index: 2, kind: output, shape index: {}]
  %s3 = sld [smem:[#allocation0]]
  $region41: #{se_module.3} parent=0
    _
  %s5 = ssub.s32 1, %s3
  %s6 = scalar_select 0, %s5, %s3
  loop: start=0, step=1, limit=4
  $region2: #{se_module.3} parent=0 // loop_pre_header
    _
  $region3: #{se_module.3} parent=0 // loop_header
    %s8 = sphi 0, %s12
    %p9 = scmp.ge.s32.totalorder %s8, 4
    %s15 = sphi 0, %s27
    %s16 = sphi 0, %s23
    %s17 = sphi 0, %s15
    %s18 = sphi 0, %s16
    %s19 = sphi 0, %s17
    %s20 = sphi 0, %s18
    %s32 = sphi 0, %s34
    %s35 = sphi 0, %s32
    %s36 = sphi 0, %s35
    %s52 = sphi 0, %s36
    %s58 = sphi 0, %s60
    %s61 = sphi 0, %s58
    %s62 = sphi 0, %s61
    %s78 = sphi 0, %s62
    %s86 = sphi 0, %s88
    %s89 = sphi 0, %s86
    %s90 = sphi 0, %s89
    %s106 = sphi 0, %s90
  $region4: #{se_module.3} parent=0 // loop_header_branch
    %11 = sbr.rel (%p9) target = $region8
  $region5: #{se_module.3} parent=0 // loop_body
    %s13 = ssub.s32 %s8, 1
    %s14 = ssub.s32 %s8, 2
    %s21 = sadd.s32 1, %s16
    %p22 = scmp.ge.s32.totalorder %s21, 1
    %s23 = scalar_select %p22, 0, %s21
    %s24 = sadd.s32 1, %s15
    %s25 = scalar_select %p22, %s24, %s15
    %p26 = scmp.ge.s32.totalorder %s25, 2
    %s27 = scalar_select %p26, 0, %s25
    %s28 = ssub.s32 %s15, %s27
    %s29 = ssub.s32 %s16, %s23
    %s30 = sor.u32 %s28, %s29
    %p31 = scmp.eq.s32.totalorder %s30, 0
    %s33 = sadd.s32 %s32, 1
    %s34 = scalar_select %p31, %s32, %s33
    %p37 = pneg %p31
    %p38 = scmp.eq.s32.totalorder %s8, 1
    %p39 = por %p37, %p38
    %p40 = scmp.ne.s32.totalorder %s32, %s35
    %p41 = scmp.eq.s32.totalorder %s8, 0
    %p42 = por %p40, %p41
    %p43 = scmp.ne.s32.totalorder %s32, %s35
    %p44 = scmp.eq.s32.totalorder %s13, 1
    %p45 = por %p43, %p44
    %p46 = scmp.ne.s32.totalorder %s35, %s36
    %p47 = scmp.eq.s32.totalorder %s13, 0
    %p48 = por %p46, %p47
    %p49 = scmp.ne.s32.totalorder %s35, %s36
    %p50 = scmp.eq.s32.totalorder %s14, 1
    %p51 = por %p49, %p50
    %p53 = scmp.ne.s32.totalorder %s36, %s52
    %p54 = scmp.eq.s32.totalorder %s14, 0
    %p55 = por %p53, %p54
    %s56 = ssub.s32 %s15, %s27
    %p57 = scmp.eq.s32.totalorder %s56, 0
    %s59 = sadd.s32 %s58, 1
    %s60 = scalar_select %p57, %s58, %s59
    %p63 = pneg %p57
    %p64 = scmp.eq.s32.totalorder %s8, 1
    %p65 = por %p63, %p64
    %p66 = scmp.ne.s32.totalorder %s58, %s61
    %p67 = scmp.eq.s32.totalorder %s8, 0
    %p68 = por %p66, %p67
    %p69 = scmp.ne.s32.totalorder %s58, %s61
    %p70 = scmp.eq.s32.totalorder %s13, 1
    %p71 = por %p69, %p70
    %p72 = scmp.ne.s32.totalorder %s61, %s62
    %p73 = scmp.eq.s32.totalorder %s13, 0
    %p74 = por %p72, %p73
    %p75 = scmp.ne.s32.totalorder %s61, %s62
    %p76 = scmp.eq.s32.totalorder %s14, 1
    %p77 = por %p75, %p76
    %p79 = scmp.ne.s32.totalorder %s62, %s78
    %p80 = scmp.eq.s32.totalorder %s14, 0
    %p81 = por %p79, %p80
    %s82 = ssub.s32 %s15, %s27
    %s83 = ssub.s32 %s16, %s23
    %s84 = sor.u32 %s82, %s83
    %p85 = scmp.eq.s32.totalorder %s84, 0
    %s87 = sadd.s32 %s86, 1
    %s88 = scalar_select %p85, %s86, %s87
    %p91 = pneg %p85
    %p92 = scmp.eq.s32.totalorder %s8, 1
    %p93 = por %p91, %p92
    %p94 = scmp.ne.s32.totalorder %s86, %s89
    %p95 = scmp.eq.s32.totalorder %s8, 0
    %p96 = por %p94, %p95
    %p97 = scmp.ne.s32.totalorder %s86, %s89
    %p98 = scmp.eq.s32.totalorder %s13, 1
    %p99 = por %p97, %p98
    %p100 = scmp.ne.s32.totalorder %s89, %s90
    %p101 = scmp.eq.s32.totalorder %s13, 0
    %p102 = por %p100, %p101
    %p103 = scmp.ne.s32.totalorder %s89, %s90
    %p104 = scmp.eq.s32.totalorder %s14, 1
    %p105 = por %p103, %p104
    %p107 = scmp.ne.s32.totalorder %s90, %s106
    %p108 = scmp.eq.s32.totalorder %s14, 0
    %p109 = por %p107, %p108
    %p110 = scmp.le.s32.totalorder 1, %s8
    %p111 = scmp.lt.s32.totalorder %s8, 3
    %p112 = pnand %p110, %p111
    %p113 = pneg %p112
    // Predicated region
    $region9: #{se_module.3} parent=5 // pred_check
      _
    $region10: #{se_module.3} parent=5 // pred_check_branch
      %115 = sbr.rel (%p112) target = $region12
    $region11: #{se_module.3} parent=5 // pred_region
      %s116 = ssub.s32 %s8, 1
    $region12: #{se_module.3} parent=5 // pred_fallthru
      _
    %p117 = scmp.lt.s32.totalorder %s8, 2
    // Predicated region
    $region13: #{se_module.3} parent=5 // pred_check
      %p118 = pneg %p117
    $region14: #{se_module.3} parent=5 // pred_check_branch
      %120 = sbr.rel (%p118) target = $region16
    $region15: #{se_module.3} parent=5 // pred_region
      // Predicated region
      $region17: #{se_module.3} parent=15 // pred_check
        %p121 = pneg %p42
      $region18: #{se_module.3} parent=15 // pred_check_branch
        %123 = sbr.rel (%p121) target = $region20
      $region19: #{se_module.3} parent=15 // pred_region
        %s124 = smul.u32 2, %s16
        %p125 = scmp.lt.s32.totalorder %s15, 1
        %s126 = scalar_select %p125, %s15, 1
        %p127 = scmp.lt.s32.totalorder %s124, 1
        %s128 = scalar_select %p127, %s124, 1
        %s129 = smul.addr %s126, 2
        %s130 = sadd.s32 %s128, %s129
        %s131 = smul.addr %s130, 4
        %s132 = scalar_lea.vmem %s0, %s131
        %s133 = smul.u32 2, %s16
      $region20: #{se_module.3} parent=15 // pred_fallthru
        _
      // Predicated region
      $region21: #{se_module.3} parent=15 // pred_check
        %p134 = pneg %p68
      $region22: #{se_module.3} parent=15 // pred_check_branch
        %136 = sbr.rel (%p134) target = $region24
      $region23: #{se_module.3} parent=15 // pred_region
        %p137 = scmp.lt.s32.totalorder %s15, 1
        %s138 = scalar_select %p137, %s15, 1
        %s139 = smul.addr %s138, 4
        %s140 = scalar_lea.vmem %s1, %s139
      $region24: #{se_module.3} parent=15 // pred_fallthru
        _
    $region16: #{se_module.3} parent=5 // pred_fallthru
      _
    %p141 = scmp.le.s32.totalorder 1, %s8
    %p142 = scmp.lt.s32.totalorder %s8, 3
    %p143 = pnand %p141, %p142
    %p144 = pneg %p143
    // Predicated region
    $region25: #{se_module.3} parent=5 // pred_check
      _
    $region26: #{se_module.3} parent=5 // pred_check_branch
      %146 = sbr.rel (%p143) target = $region28
    $region27: #{se_module.3} parent=5 // pred_region
      %s147 = ssub.s32 %s8, 1
      %s148 = smul.u32 2, %s18
      %p149 = scmp.lt.s32.totalorder %s17, 1
      %s150 = scalar_select %p149, %s17, 1
      %p151 = scmp.lt.s32.totalorder %s148, 1
      %s152 = scalar_select %p151, %s148, 1
      %s153 = smul.addr %s150, 2
      %s154 = sadd.s32 %s152, %s153
      %s155 = smul.addr %s154, 4
      %s156 = scalar_lea.vmem %s0, %s155
      %p157 = pneg %p48
      %p158 = pneg %p45
      %p159 = scmp.lt.s32.totalorder %s17, 1
      %s160 = scalar_select %p159, %s17, 1
      %s161 = smul.addr %s160, 4
      %s162 = scalar_lea.vmem %s1, %s161
      %p163 = pneg %p74
      %p164 = pneg %p71
      %p165 = pneg %p102
      %p166 = pneg %p99
      %s167 = smul.u32 2, %s18
      %p168 = scmp.lt.s32.totalorder %s17, 1
      %s169 = scalar_select %p168, %s17, 1
      %p170 = scmp.lt.s32.totalorder %s167, 1
      %s171 = scalar_select %p170, %s167, 1
      %s172 = smul.addr %s169, 2
      %s173 = sadd.s32 %s171, %s172
      %s174 = smul.addr %s173, 4
      %s175 = scalar_lea.vmem %s2, %s174
      %s176 = smul.u32 2, %s18
      %p177 = scmp.lt.s32.totalorder %s17, 1
      %s178 = scalar_select %p177, %s17, 1
      %p179 = scmp.lt.s32.totalorder %s176, 1
      %s180 = scalar_select %p179, %s176, 1
      %s181 = smul.addr %s178, 2
      %s182 = sadd.s32 %s180, %s181
      %s183 = smul.addr %s182, 4
      %s184 = scalar_lea.vmem %s0, %s183
      %s185 = smul.u32 2, %s18
      %p186 = scmp.lt.s32.totalorder %s17, 1
      %s187 = scalar_select %p186, %s17, 1
      %s188 = smul.addr %s187, 4
      %s189 = scalar_lea.vmem %s1, %s188
      %s190 = smul.u32 2, %s18
      %p191 = scmp.lt.s32.totalorder %s17, 1
      %s192 = scalar_select %p191, %s17, 1
      %p193 = scmp.lt.s32.totalorder %s190, 1
      %s194 = scalar_select %p193, %s190, 1
      %s195 = smul.addr %s192, 2
      %s196 = sadd.s32 %s194, %s195
      %s197 = smul.addr %s196, 4
      %s198 = scalar_lea.vmem %s2, %s197
      %s199 = smul.u32 2, %s18
      %v200 = vld [vmem:[%s184] sm:$0xff]
      %v201 = vld [vmem:[%s189] sm:$0xf]
      %203 = vset.pattern.permute.xlu0 0
      %204 = vperm.xlu0 %203, %v201
      %v205 = vpop.permute.xlu0 %204
      %v207 = vunpack.c.l.s4 839922192
      %v208 = vunpack.c.0.s8 %v207
      %v209 = vperm.slane %v205, %v208
      %v211 = vmul.f32 %v200, %v209
      %212 = vst [vmem:[%s198] sm:$0xff] %v211
      %s213 = smul.u32 2, %s18
      %p214 = scmp.lt.s32.totalorder %s17, 1
      %s215 = scalar_select %p214, %s17, 1
      %p216 = scmp.lt.s32.totalorder %s213, 1
      %s217 = scalar_select %p216, %s213, 1
      %s218 = smul.addr %s215, 2
      %s219 = sadd.s32 %s217, %s218
      %s220 = smul.addr %s219, 4
      %s221 = scalar_lea.vmem %s2, %s220
      // Predicated region
      $region29: #{se_module.3} parent=27 // pred_check
        %p222 = pneg %p99
      $region30: #{se_module.3} parent=27 // pred_check_branch
        %224 = sbr.rel (%p222) target = $region32
      $region31: #{se_module.3} parent=27 // pred_region
        %s225 = smul.u32 2, %s18
      $region32: #{se_module.3} parent=27 // pred_fallthru
        _
    $region28: #{se_module.3} parent=5 // pred_fallthru
      _
    %p226 = scmp.le.s32.totalorder 2, %s8
    // Predicated region
    $region33: #{se_module.3} parent=5 // pred_check
      %p227 = pneg %p226
    $region34: #{se_module.3} parent=5 // pred_check_branch
      %229 = sbr.rel (%p227) target = $region36
    $region35: #{se_module.3} parent=5 // pred_region
      %s230 = ssub.s32 %s8, 2
      // Predicated region
      $region37: #{se_module.3} parent=35 // pred_check
        %p231 = pneg %p105
      $region38: #{se_module.3} parent=35 // pred_check_branch
        %233 = sbr.rel (%p231) target = $region40
      $region39: #{se_module.3} parent=35 // pred_region
        %s234 = smul.u32 2, %s20
        %p235 = scmp.lt.s32.totalorder %s19, 1
        %s236 = scalar_select %p235, %s19, 1
        %p237 = scmp.lt.s32.totalorder %s234, 1
        %s238 = scalar_select %p237, %s234, 1
        %s239 = smul.addr %s236, 2
        %s240 = sadd.s32 %s238, %s239
        %s241 = smul.addr %s240, 4
        %s242 = scalar_lea.vmem %s2, %s241
      $region40: #{se_module.3} parent=35 // pred_fallthru
        _
    $region36: #{se_module.3} parent=5 // pred_fallthru
      _
  $region6: #{se_module.3} parent=0 // loop_footer
    %s12 = sadd.s32 1, %s8
  $region7: #{se_module.3} parent=0 // loop_footer_branch
    %7 = sbr.rel target = $region3
  $region8: #{se_module.3} parent=0 // loop_exit
    _

// kernel: se_module.2
$region0: #{se_module.2}
  #allocation0 [shape = 'u32[]', space=smem, size = 0x4, offset = 0x4, fixed_abs, tag = 'smem constant byte address 0x4 - core index']
  #allocation1 [shape = 'u32[72,128]{1,0:T(1,128)}', space=vmem, size = 0x9000, scoped, tag = 'internal scratch']
  #allocation2 [shape = 'f32[4,1]{1,0:T(4,128)}', space=vmem, size = 0x800, scoped, tag = 'scratch operand']
  %s0 = inlined_call_operand.vmem [shape: f32[2,4,256], index: 0, kind: input, shape index: {}]
  %s1 = inlined_call_operand.vmem [shape: f32[4,2], index: 1, kind: input, shape index: {}]
  %s2 = inlined_call_operand.vmem [shape: f32[1,2], index: 2, kind: input, shape index: {}]
  %s3 = inlined_call_operand.vmem [shape: f32[4,2], index: 3, kind: input, shape index: {}]
  %s4 = inlined_call_operand.vmem [shape: f32[4,1], index: 4, kind: input, shape index: {}]
  %s5 = inlined_call_operand.vmem [shape: f32[2,4,1], index: 5, kind: output, shape index: {}]
  %s6 = sld [smem:[#allocation0]]
  $region61: #{se_module.2} parent=0
    _
  %s8 = ssub.s32 1, %s6
  %s9 = scalar_select 0, %s8, %s6
  loop: start=0, step=1, limit=4
  $region2: #{se_module.2} parent=0 // loop_pre_header
    _
  $region3: #{se_module.2} parent=0 // loop_header
    %s11 = sphi 0, %s15
    %p12 = scmp.ge.s32.totalorder %s11, 4
    %s18 = sphi 0, %s30
    %s19 = sphi 0, %s26
    %s20 = sphi 0, %s18
    %s21 = sphi 0, %s19
    %s22 = sphi 0, %s20
    %s23 = sphi 0, %s21
    %s35 = sphi 0, %s37
    %s38 = sphi 0, %s35
    %s39 = sphi 0, %s38
    %s55 = sphi 0, %s39
    %s59 = sphi 0, %s59
    %s61 = sphi 0, %s59
    %s62 = sphi 0, %s61
    %s76 = sphi 0, %s62
    %s80 = sphi 0, %s80
    %s82 = sphi 0, %s80
    %s83 = sphi 0, %s82
    %s97 = sphi 0, %s83
    %s101 = sphi 0, %s101
    %s103 = sphi 0, %s101
    %s104 = sphi 0, %s103
    %s118 = sphi 0, %s104
    %s122 = sphi 0, %s122
    %s124 = sphi 0, %s122
    %s125 = sphi 0, %s124
    %s139 = sphi 0, %s125
    %s145 = sphi 0, %s147
    %s148 = sphi 0, %s145
    %s149 = sphi 0, %s148
    %s165 = sphi 0, %s149
  $region4: #{se_module.2} parent=0 // loop_header_branch
    %14 = sbr.rel (%p12) target = $region8
  $region5: #{se_module.2} parent=0 // loop_body
    %s16 = ssub.s32 %s11, 1
    %s17 = ssub.s32 %s11, 2
    %s24 = sadd.s32 1, %s19
    %p25 = scmp.ge.s32.totalorder %s24, 1
    %s26 = scalar_select %p25, 0, %s24
    %s27 = sadd.s32 1, %s18
    %s28 = scalar_select %p25, %s27, %s18
    %p29 = scmp.ge.s32.totalorder %s28, 2
    %s30 = scalar_select %p29, 0, %s28
    %s31 = ssub.s32 %s18, %s30
    %s32 = ssub.s32 %s19, %s26
    %s33 = sor.u32 %s31, %s32
    %p34 = scmp.eq.s32.totalorder %s33, 0
    %s36 = sadd.s32 %s35, 1
    %s37 = scalar_select %p34, %s35, %s36
    %p40 = pneg %p34
    %p41 = scmp.eq.s32.totalorder %s11, 1
    %p42 = por %p40, %p41
    %p43 = scmp.ne.s32.totalorder %s35, %s38
    %p44 = scmp.eq.s32.totalorder %s11, 0
    %p45 = por %p43, %p44
    %p46 = scmp.ne.s32.totalorder %s35, %s38
    %p47 = scmp.eq.s32.totalorder %s16, 1
    %p48 = por %p46, %p47
    %p49 = scmp.ne.s32.totalorder %s38, %s39
    %p50 = scmp.eq.s32.totalorder %s16, 0
    %p51 = por %p49, %p50
    %p52 = scmp.ne.s32.totalorder %s38, %s39
    %p53 = scmp.eq.s32.totalorder %s17, 1
    %p54 = por %p52, %p53
    %p56 = scmp.ne.s32.totalorder %s39, %s55
    %p57 = scmp.eq.s32.totalorder %s17, 0
    %p58 = por %p56, %p57
    %s60 = sadd.s32 %s59, 1
    %p63 = scmp.eq.s32.totalorder %s11, 1
    %p64 = scmp.ne.s32.totalorder %s59, %s61
    %p65 = scmp.eq.s32.totalorder %s11, 0
    %p66 = por %p64, %p65
    %p67 = scmp.ne.s32.totalorder %s59, %s61
    %p68 = scmp.eq.s32.totalorder %s16, 1
    %p69 = por %p67, %p68
    %p70 = scmp.ne.s32.totalorder %s61, %s62
    %p71 = scmp.eq.s32.totalorder %s16, 0
    %p72 = por %p70, %p71
    %p73 = scmp.ne.s32.totalorder %s61, %s62
    %p74 = scmp.eq.s32.totalorder %s17, 1
    %p75 = por %p73, %p74
    %p77 = scmp.ne.s32.totalorder %s62, %s76
    %p78 = scmp.eq.s32.totalorder %s17, 0
    %p79 = por %p77, %p78
    %s81 = sadd.s32 %s80, 1
    %p84 = scmp.eq.s32.totalorder %s11, 1
    %p85 = scmp.ne.s32.totalorder %s80, %s82
    %p86 = scmp.eq.s32.totalorder %s11, 0
    %p87 = por %p85, %p86
    %p88 = scmp.ne.s32.totalorder %s80, %s82
    %p89 = scmp.eq.s32.totalorder %s16, 1
    %p90 = por %p88, %p89
    %p91 = scmp.ne.s32.totalorder %s82, %s83
    %p92 = scmp.eq.s32.totalorder %s16, 0
    %p93 = por %p91, %p92
    %p94 = scmp.ne.s32.totalorder %s82, %s83
    %p95 = scmp.eq.s32.totalorder %s17, 1
    %p96 = por %p94, %p95
    %p98 = scmp.ne.s32.totalorder %s83, %s97
    %p99 = scmp.eq.s32.totalorder %s17, 0
    %p100 = por %p98, %p99
    %s102 = sadd.s32 %s101, 1
    %p105 = scmp.eq.s32.totalorder %s11, 1
    %p106 = scmp.ne.s32.totalorder %s101, %s103
    %p107 = scmp.eq.s32.totalorder %s11, 0
    %p108 = por %p106, %p107
    %p109 = scmp.ne.s32.totalorder %s101, %s103
    %p110 = scmp.eq.s32.totalorder %s16, 1
    %p111 = por %p109, %p110
    %p112 = scmp.ne.s32.totalorder %s103, %s104
    %p113 = scmp.eq.s32.totalorder %s16, 0
    %p114 = por %p112, %p113
    %p115 = scmp.ne.s32.totalorder %s103, %s104
    %p116 = scmp.eq.s32.totalorder %s17, 1
    %p117 = por %p115, %p116
    %p119 = scmp.ne.s32.totalorder %s104, %s118
    %p120 = scmp.eq.s32.totalorder %s17, 0
    %p121 = por %p119, %p120
    %s123 = sadd.s32 %s122, 1
    %p126 = scmp.eq.s32.totalorder %s11, 1
    %p127 = scmp.ne.s32.totalorder %s122, %s124
    %p128 = scmp.eq.s32.totalorder %s11, 0
    %p129 = por %p127, %p128
    %p130 = scmp.ne.s32.totalorder %s122, %s124
    %p131 = scmp.eq.s32.totalorder %s16, 1
    %p132 = por %p130, %p131
    %p133 = scmp.ne.s32.totalorder %s124, %s125
    %p134 = scmp.eq.s32.totalorder %s16, 0
    %p135 = por %p133, %p134
    %p136 = scmp.ne.s32.totalorder %s124, %s125
    %p137 = scmp.eq.s32.totalorder %s17, 1
    %p138 = por %p136, %p137
    %p140 = scmp.ne.s32.totalorder %s125, %s139
    %p141 = scmp.eq.s32.totalorder %s17, 0
    %p142 = por %p140, %p141
    %s143 = ssub.s32 %s18, %s30
    %p144 = scmp.eq.s32.totalorder %s143, 0
    %s146 = sadd.s32 %s145, 1
    %s147 = scalar_select %p144, %s145, %s146
    %p150 = pneg %p144
    %p151 = scmp.eq.s32.totalorder %s11, 1
    %p152 = por %p150, %p151
    %p153 = scmp.ne.s32.totalorder %s145, %s148
    %p154 = scmp.eq.s32.totalorder %s11, 0
    %p155 = por %p153, %p154
    %p156 = scmp.ne.s32.totalorder %s145, %s148
    %p157 = scmp.eq.s32.totalorder %s16, 1
    %p158 = por %p156, %p157
    %p159 = scmp.ne.s32.totalorder %s148, %s149
    %p160 = scmp.eq.s32.totalorder %s16, 0
    %p161 = por %p159, %p160
    %p162 = scmp.ne.s32.totalorder %s148, %s149
    %p163 = scmp.eq.s32.totalorder %s17, 1
    %p164 = por %p162, %p163
    %p166 = scmp.ne.s32.totalorder %s149, %s165
    %p167 = scmp.eq.s32.totalorder %s17, 0
    %p168 = por %p166, %p167
    %p169 = scmp.le.s32.totalorder 1, %s11
    %p170 = scmp.lt.s32.totalorder %s11, 3
    %p171 = pnand %p169, %p170
    %p172 = pneg %p171
    // Predicated region
    $region9: #{se_module.2} parent=5 // pred_check
      _
    $region10: #{se_module.2} parent=5 // pred_check_branch
      %174 = sbr.rel (%p171) target = $region12
    $region11: #{se_module.2} parent=5 // pred_region
      %s175 = ssub.s32 %s11, 1
      // Predicated region
      $region13: #{se_module.2} parent=11 // pred_check
        %p176 = pneg %p72
      $region14: #{se_module.2} parent=11 // pred_check_branch
        %178 = sbr.rel (%p176) target = $region16
      $region15: #{se_module.2} parent=11 // pred_region
        _
      $region16: #{se_module.2} parent=11 // pred_fallthru
        _
      // Predicated region
      $region17: #{se_module.2} parent=11 // pred_check
        %p179 = pneg %p93
      $region18: #{se_module.2} parent=11 // pred_check_branch
        %181 = sbr.rel (%p179) target = $region20
      $region19: #{se_module.2} parent=11 // pred_region
        _
      $region20: #{se_module.2} parent=11 // pred_fallthru
        _
      // Predicated region
      $region21: #{se_module.2} parent=11 // pred_check
        %p182 = pneg %p114
      $region22: #{se_module.2} parent=11 // pred_check_branch
        %184 = sbr.rel (%p182) target = $region24
      $region23: #{se_module.2} parent=11 // pred_region
        _
      $region24: #{se_module.2} parent=11 // pred_fallthru
        _
      // Predicated region
      $region25: #{se_module.2} parent=11 // pred_check
        %p185 = pneg %p135
      $region26: #{se_module.2} parent=11 // pred_check_branch
        %187 = sbr.rel (%p185) target = $region28
      $region27: #{se_module.2} parent=11 // pred_region
        _
      $region28: #{se_module.2} parent=11 // pred_fallthru
        _
    $region12: #{se_module.2} parent=5 // pred_fallthru
      _
    %p188 = scmp.lt.s32.totalorder %s11, 2
    // Predicated region
    $region29: #{se_module.2} parent=5 // pred_check
      %p189 = pneg %p188
    $region30: #{se_module.2} parent=5 // pred_check_branch
      %191 = sbr.rel (%p189) target = $region32
    $region31: #{se_module.2} parent=5 // pred_region
      // Predicated region
      $region33: #{se_module.2} parent=31 // pred_check
        %p192 = pneg %p45
      $region34: #{se_module.2} parent=31 // pred_check_branch
        %194 = sbr.rel (%p192) target = $region36
      $region35: #{se_module.2} parent=31 // pred_region
        %s195 = smul.u32 2, %s19
        %p196 = scmp.lt.s32.totalorder %s18, 1
        %s197 = scalar_select %p196, %s18, 1
        %p198 = scmp.lt.s32.totalorder %s195, 1
        %s199 = scalar_select %p198, %s195, 1
        %s200 = smul.addr %s197, 2
        %s201 = sadd.s32 %s199, %s200
        %s202 = smul.addr %s201, 4
        %s203 = scalar_lea.vmem %s0, %s202
        %s204 = smul.u32 2, %s19
      $region36: #{se_module.2} parent=31 // pred_fallthru
        _
    $region32: #{se_module.2} parent=5 // pred_fallthru
      _
    %p205 = scmp.le.s32.totalorder 1, %s11
    %p206 = scmp.lt.s32.totalorder %s11, 3
    %p207 = pnand %p205, %p206
    %p208 = pneg %p207
    // Predicated region
    $region37: #{se_module.2} parent=5 // pred_check
      _
    $region38: #{se_module.2} parent=5 // pred_check_branch
      %210 = sbr.rel (%p207) target = $region40
    $region39: #{se_module.2} parent=5 // pred_region
      %s211 = ssub.s32 %s11, 1
      %s212 = smul.u32 2, %s21
      %p213 = scmp.lt.s32.totalorder %s20, 1
      %s214 = scalar_select %p213, %s20, 1
      %p215 = scmp.lt.s32.totalorder %s212, 1
      %s216 = scalar_select %p215, %s212, 1
      %s217 = smul.addr %s214, 2
      %s218 = sadd.s32 %s216, %s217
      %s219 = smul.addr %s218, 4
      %s220 = scalar_lea.vmem %s0, %s219
      %p221 = pneg %p51
      %p222 = pneg %p48
      %p223 = pneg %p72
      %p224 = pneg %p69
      %p225 = pneg %p93
      %p226 = pneg %p90
      %p227 = pneg %p114
      %p228 = pneg %p111
      %p229 = pneg %p135
      %p230 = pneg %p132
      %p231 = pneg %p161
      %p232 = pneg %p158
      %p233 = scmp.lt.s32.totalorder %s20, 1
      %s234 = scalar_select %p233, %s20, 1
      %s235 = smul.addr %s234, 4
      %s236 = scalar_lea.vmem %s5, %s235
      %s237 = smul.u32 2, %s21
      %p238 = scmp.lt.s32.totalorder %s20, 1
      %s239 = scalar_select %p238, %s20, 1
      %p240 = scmp.lt.s32.totalorder %s237, 1
      %s241 = scalar_select %p240, %s237, 1
      %s242 = smul.addr %s239, 2
      %s243 = sadd.s32 %s241, %s242
      %s244 = smul.addr %s243, 4
      %s245 = scalar_lea.vmem %s0, %s244
      %s246 = smul.u32 2, %s21
      %p247 = scmp.lt.s32.totalorder %s20, 1
      %s248 = scalar_select %p247, %s20, 1
      %s249 = smul.addr %s248, 4
      %s250 = scalar_lea.vmem %s5, %s249
      %p251 = scmp.eq.s32.totalorder %s21, 0
      // Predicated region
      $region41: #{se_module.2} parent=39 // pred_check
        %p252 = pneg %p251
      $region42: #{se_module.2} parent=39 // pred_check_branch
        %254 = sbr.rel (%p252) target = $region44
      $region43: #{se_module.2} parent=39 // pred_region
        %vm255 = vcmask 3072
        %256 = vst.msk [vmem:[#allocation2] sm:$0xf] %vm255, 0.0
      $region44: #{se_module.2} parent=39 // pred_fallthru
        _
      %v257 = vld [vmem:[#allocation2] sm:$0xf]
      %v258 = vld [vmem:[%s245] sm:$0xff]
      %260 = vst [vmem:[#allocation1] ss:$2 sm:$0xff] %v258
      %v261 = vld.sshfl [vmem:[#allocation1] sm:$0xff pattern:$0x75316420]
      %v262 = vld.sshfl [vmem:[#allocation1 + $0x8] sm:$0xff pattern:$0x75316420]
      %vm265 = vcmask 1043456
      %v266 = vsel %vm265, %v261, 0.0
      %v267 = vsel %vm265, %v262, 0.0
      %v268 = vadd.f32 %v266, %v267
      %269 = vadd.xlane.f32.xlu0 %v268
      %v270 = vpop.xlane.xlu0 %269
      %v271 = vadd.f32 %v257, %v270
      %vm272 = vcmask 3072
      %273 = vst.msk [vmem:[#allocation2] sm:$0xf] %vm272, %v271
      // Predicated region
      $region45: #{se_module.2} parent=39 // pred_check
        %p274 = pneg %p251
      $region46: #{se_module.2} parent=39 // pred_check_branch
        %276 = sbr.rel (%p274) target = $region48
      $region47: #{se_module.2} parent=39 // pred_region
        %v277 = vld [vmem:[#allocation2] sm:$0xf]
        %v278 = vmul.f32 %v277, 0.00390625
        %v279 = vld [vmem:[%s1] sm:$0xf]
        %281 = vset.pattern.permute.xlu0 0
        %282 = vperm.xlu0 %281, %v278
        %v283 = vpop.permute.xlu0 %282
        %v285 = vmul.f32 %v279, %v283
        %vm286 = vcmask 11264
        %v287 = vsel %vm286, %v285, 0.0
        %v288 = vrot.slane %v287, 4
        %v289 = vadd.f32 %v287, %v288
        %v290 = vrot.slane %v289, 2
        %v291 = vadd.f32 %v289, %v290
        %v292 = vrot.slane %v291, 1
        %v293 = vadd.f32 %v291, %v292
        %v294 = vld [vmem:[%s2] sm:$0x1]
        %v295 = vadd.f32 %v293, %v294
        %v296 = vxor.u32 %v295, 2147483648
        %v297 = vmul.f32 %v296, 1.442695
        %v298 = vpow.pop %v297
        %v299 = vadd.f32 %v298, 1.0
        %v300 = vrcp.pop %v299
        %v301 = vmul.f32 %v299, %v300
        %v302 = vsub.f32 1.0, %v301
        %v303 = vmul.f32 %v300, %v302
        %v304 = vadd.f32 %v300, %v303
        %vm305 = vweird.f32 %v299
        %vm306 = vweird.f32 %v300
        %vm307 = vmor %vm305, %vm306
        %v308 = vsel %vm307, %v300, %v304
        %v309 = vand.u32 2147483647, %v299
        %vm310 = vcmp.eq.f32.partialorder %v309, 8.507059e+37
        %v311 = vand.u32 %v299, 2147483648
        %v312 = vor.u32 1.1754944e-38, %v311
        %v313 = vsel %vm310, %v312, %v308
        %v314 = vmul.f32 1.0, %v313
        %v315 = vmul.f32 %v295, %v314
        %v316 = vld [vmem:[%s3] sm:$0xf]
        %v317 = vperm.slane %v315, 0
        %v318 = vmul.f32 %v316, %v317
        %v319 = vsel %vm286, %v318, 0.0
        %320 = vadd.xlane.f32.xlu0 %v319
        %v321 = vpop.xlane.xlu0 %320
        %v322 = vld [vmem:[%s4] sm:$0xf]
        %v323 = vadd.f32 %v321, %v322
        %v324 = vxor.u32 %v323, 2147483648
        %v325 = vmul.f32 %v324, 1.442695
        %v326 = vpow.pop %v325
        %v327 = vadd.f32 %v326, 1.0
        %v328 = vrcp.pop %v327
        %v329 = vmul.f32 %v327, %v328
        %v330 = vsub.f32 1.0, %v329
        %v331 = vmul.f32 %v328, %v330
        %v332 = vadd.f32 %v328, %v331
        %vm333 = vweird.f32 %v327
        %vm334 = vweird.f32 %v328
        %vm335 = vmor %vm333, %vm334
        %v336 = vsel %vm335, %v328, %v332
        %v337 = vand.u32 2147483647, %v327
        %vm338 = vcmp.eq.f32.partialorder %v337, 8.507059e+37
        %v339 = vand.u32 %v327, 2147483648
        %v340 = vor.u32 1.1754944e-38, %v339
        %v341 = vsel %vm338, %v340, %v336
        %v342 = vmul.f32 1.0, %v341
        %343 = vst.msk [vmem:[%s250] sm:$0xf] %vm272, %v342
      $region48: #{se_module.2} parent=39 // pred_fallthru
        _
      %p344 = scmp.lt.s32.totalorder %s20, 1
      %s345 = scalar_select %p344, %s20, 1
      %s346 = smul.addr %s345, 4
      %s347 = scalar_lea.vmem %s5, %s346
      // Predicated region
      $region49: #{se_module.2} parent=39 // pred_check
        %p348 = pneg %p158
      $region50: #{se_module.2} parent=39 // pred_check_branch
        %350 = sbr.rel (%p348) target = $region52
      $region51: #{se_module.2} parent=39 // pred_region
        _
      $region52: #{se_module.2} parent=39 // pred_fallthru
        _
    $region40: #{se_module.2} parent=5 // pred_fallthru
      _
    %p351 = scmp.le.s32.totalorder 2, %s11
    // Predicated region
    $region53: #{se_module.2} parent=5 // pred_check
      %p352 = pneg %p351
    $region54: #{se_module.2} parent=5 // pred_check_branch
      %354 = sbr.rel (%p352) target = $region56
    $region55: #{se_module.2} parent=5 // pred_region
      %s355 = ssub.s32 %s11, 2
      // Predicated region
      $region57: #{se_module.2} parent=55 // pred_check
        %p356 = pneg %p164
      $region58: #{se_module.2} parent=55 // pred_check_branch
        %358 = sbr.rel (%p356) target = $region60
      $region59: #{se_module.2} parent=55 // pred_region
        %p359 = scmp.lt.s32.totalorder %s22, 1
        %s360 = scalar_select %p359, %s22, 1
        %s361 = smul.addr %s360, 4
        %s362 = scalar_lea.vmem %s5, %s361
      $region60: #{se_module.2} parent=55 // pred_fallthru
        _
    $region56: #{se_module.2} parent=5 // pred_fallthru
      _
  $region6: #{se_module.2} parent=0 // loop_footer
    %s15 = sadd.s32 1, %s11
  $region7: #{se_module.2} parent=0 // loop_footer_branch
    %10 = sbr.rel target = $region3
  $region8: #{se_module.2} parent=0 // loop_exit
    _

</llo_original>
